<compile_context>
chip_gen: v5e
topology: v5e:2x2
jax: 0.10.0
libtpu: 0.0.40
codegen_flags: <defaults>
</compile_context>

<pallas_src>
import functools

import jax
import jax.numpy as jnp
from jax.experimental import pallas as pl
from jax.experimental.pallas import tpu as pltpu


def _inconv_kernel(xe_ref, w_ref, bias_ref, o_ref, *, width):
    """Fused conv3x3(pad=1) + folded-BN bias + ReLU for one image.

    xe_ref:   (1, Cin, L)        flat image with (W+1)-zero halo, L = H*W + 2*W + 2
    w_ref:    (3, 3, Cout, Cin)  BN-folded per-tap weight matrices
    bias_ref: (Cout, 1)          folded bias (conv bias + BN shift)
    o_ref:    (1, Cout, H*W)     output block (NCHW with spatial flattened)
    """
    cout = o_ref.shape[1]
    hw = o_ref.shape[2]

    # Column index of every flattened output position (for the kw edge masks).
    col = jax.lax.broadcasted_iota(jnp.int32, (cout, hw), 1) % width

    acc = jnp.zeros((cout, hw), jnp.float32)
    for kw in range(3):
        part = jnp.zeros((cout, hw), jnp.float32)
        for kh in range(3):
            off = kh * width + kw                       # static shift of the tap
            tap = xe_ref[0, :, off:off + hw]            # (Cin, H*W)
            part += jnp.dot(w_ref[kh, kw], tap,
                            preferred_element_type=jnp.float32)
        # Row (kh) out-of-bounds taps already read zeros from the halo; only
        # the column wrap-around (left/right image edge) needs masking.
        if kw == 0:
            part = jnp.where(col > 0, part, 0.0)            # w-1 invalid at w==0
        elif kw == 2:
            part = jnp.where(col < width - 1, part, 0.0)    # w+1 invalid at w==W-1
        acc = acc + part

    # Folded-BN bias + ReLU, all in f32 (v5e has no bf16 VPU).
    y = jnp.maximum(acc + bias_ref[...], 0.0)
    o_ref[0] = y.astype(o_ref.dtype)


@jax.jit
def inconv_forward(x_nchw, w_oihw, conv_bias, bn_gamma, bn_beta,
                   bn_mean, bn_var, eps=1e-5):
    """Forward pass of `inconv`: conv3x3(pad=1) -> BN(eval) -> ReLU, NCHW in/out."""
    N, Cin, H, W = x_nchw.shape
    Cout = w_oihw.shape[0]
    HW = H * W
    L = HW + 2 * W + 2

    # ---- BN fold (cheap, per-channel) ----
    scale = bn_gamma / jnp.sqrt(bn_var + eps)                        # (Cout,)
    w_folded = (w_oihw * scale[:, None, None, None]).astype(jnp.float32)
    bias = ((conv_bias - bn_mean) * scale + bn_beta).astype(jnp.float32)

    # Per-tap (Cout, Cin) matrices, indexed [kh, kw] in the kernel.
    w_taps = jnp.transpose(w_folded, (2, 3, 0, 1))                   # (3,3,Cout,Cin)
    bias2d = bias.reshape(Cout, 1)

    # Flatten spatial dims and add a (W+1)-element zero halo on each side.
    # This is exactly one zero row above + below plus one element of slack, so
    # tap (kh, kw) of output position p lives at flat index p + kh*W + kw.
    xe = jnp.pad(x_nchw.reshape(N, Cin, HW).astype(jnp.float32),
                 ((0, 0), (0, 0), (W + 1, W + 1)))                   # (N, Cin, L)

    cost = pl.CostEstimate(
        flops=2 * N * Cout * 9 * Cin * HW,
        transcendentals=0,
        bytes_accessed=4 * (N * Cin * L + 9 * Cout * Cin + Cout + N * Cout * HW),
    )

    out = pl.pallas_call(
        functools.partial(_inconv_kernel, width=W),
        out_shape=jax.ShapeDtypeStruct((N, Cout, HW), jnp.float32),
        grid=(N,),
        in_specs=[
            pl.BlockSpec((1, Cin, L), lambda n: (n, 0, 0)),          # one image/step
            pl.BlockSpec((3, 3, Cout, Cin), lambda n: (0, 0, 0, 0)), # weights replicated
            pl.BlockSpec((Cout, 1), lambda n: (0, 0)),               # bias replicated
        ],
        out_specs=pl.BlockSpec((1, Cout, HW), lambda n: (n, 0, 0)),
        compiler_params=pltpu.CompilerParams(
            # Batch axis is embarrassingly parallel -> megacore / v7x 2-TC split.
            dimension_semantics=("parallel",),
            # NOTE: at these tiny block sizes the default scoped VMEM limit is
            # ample; raise vmem_limit_bytes here when using large H-strips.
        ),
        cost_estimate=cost,
    )(xe, w_taps, bias2d)

    # Contiguous reshape only (no transpose): (N, Cout, H*W) -> (N, Cout, H, W).
    return out.reshape(N, Cout, H, W)


def _reference_forward(x_nchw, w_oihw, conv_bias, bn_gamma, bn_beta,
                       bn_mean, bn_var, eps=1e-5):
    """Pure-JAX reference (eval-mode BN) for correctness checking."""
    y = jax.lax.conv_general_dilated(
        x_nchw, w_oihw, window_strides=(1, 1), padding="SAME",
        dimension_numbers=("NCHW", "OIHW", "NCHW"))
    y = y + conv_bias[None, :, None, None]
    y = (y - bn_mean[None, :, None, None]) / jnp.sqrt(
        bn_var[None, :, None, None] + eps)
    y = y * bn_gamma[None, :, None, None] + bn_beta[None, :, None, None]
    return jnp.maximum(y, 0.0)


if __name__ == "__main__":
    key = jax.random.PRNGKey(0)
    k_x, k_w, k_b, k_g, k_be, k_m, k_v = jax.random.split(key, 7)

    N, Cin, Cout, H, W = 2, 4, 8, 16, 16

    x = jax.random.normal(k_x, (N, Cin, H, W), jnp.float32)
    # Conv2d(in_ch, out_ch, 3) parameters (OIHW + bias), deterministic init.
    w = jax.random.normal(k_w, (Cout, Cin, 3, 3), jnp.float32) * 0.1
    b = jax.random.normal(k_b, (Cout,), jnp.float32) * 0.1
    # BatchNorm2d(out_ch) parameters (eval-mode running stats).
    gamma = 1.0 + 0.1 * jax.random.normal(k_g, (Cout,), jnp.float32)
    beta = 0.1 * jax.random.normal(k_be, (Cout,), jnp.float32)
    run_mean = 0.1 * jax.random.normal(k_m, (Cout,), jnp.float32)
    run_var = 1.0 + 0.1 * jax.random.uniform(k_v, (Cout,), jnp.float32)

    out = inconv_forward(x, w, b, gamma, beta, run_mean, run_var)
    out = jax.block_until_ready(out)

    ref = _reference_forward(x, w, b, gamma, beta, run_mean, run_var)
    assert out.shape == (N, Cout, H, W)
    assert jnp.allclose(out, ref, atol=1e-3, rtol=1e-3), \
        float(jnp.max(jnp.abs(out - ref)))

    print("KERNEL_OK")
</pallas_src>

<mosaic_0001>
module attributes {stable_mosaic.version = 11 : i64} {
  func.func @_inconv_kernel(%arg0: i32, %arg1: memref<1x4x290xf32, #tpu.memory_space<vmem>>, %arg2: memref<3x3x8x4xf32, #tpu.memory_space<vmem>>, %arg3: memref<8x1xf32, #tpu.memory_space<vmem>>, %arg4: memref<1x8x256xf32, #tpu.memory_space<vmem>>) attributes {dimension_semantics = [#tpu.dimension_semantics<parallel>], iteration_bounds = array<i64: 2>, scalar_prefetch = 0 : i64, scratch_operands = 0 : i64, tpu.core_type = #tpu.core_type<tc>, window_params = [{transform_indices = @transform_0, window_bounds = array<i64: 1, 4, 290>}, {pipeline_mode = #tpu.pipeline_mode<synchronous>, transform_indices = @transform_1, window_bounds = array<i64: 3, 3, 8, 4>}, {pipeline_mode = #tpu.pipeline_mode<synchronous>, transform_indices = @transform_2, window_bounds = array<i64: 8, 1>}, {transform_indices = @transform_3, window_bounds = array<i64: 1, 8, 256>}]} {
    %0 = tpu.iota {dimensions = array<i32: 1>} : vector<8x256xi32>
    %c16_i32 = arith.constant 16 : i32
    %c0_i32 = arith.constant 0 : i32
    %1 = arith.cmpi eq, %c16_i32, %c0_i32 : i32
    %c1_i32 = arith.constant 1 : i32
    %2 = arith.select %1, %c1_i32, %c16_i32 : i32
    %3 = vector.broadcast %2 : i32 to vector<8x256xi32>
    %4 = arith.remsi %0, %3 : vector<8x256xi32>
    %c0_i32_0 = arith.constant 0 : i32
    %5 = vector.broadcast %c0_i32_0 : i32 to vector<8x256xi32>
    %6 = arith.cmpi ne, %4, %5 : vector<8x256xi32>
    %c0_i32_1 = arith.constant 0 : i32
    %7 = vector.broadcast %c0_i32_1 : i32 to vector<8x256xi32>
    %8 = arith.cmpi slt, %4, %7 : vector<8x256xi32>
    %c0_i32_2 = arith.constant 0 : i32
    %9 = arith.cmpi slt, %2, %c0_i32_2 : i32
    %10 = vector.broadcast %9 : i1 to vector<8x256xi1>
    %11 = vector.broadcast %10 : vector<8x256xi1> to vector<8x256xi1>
    %12 = arith.xori %8, %11 : vector<8x256xi1>
    %13 = arith.andi %12, %6 : vector<8x256xi1>
    %14 = vector.broadcast %2 : i32 to vector<8x256xi32>
    %15 = arith.addi %4, %14 : vector<8x256xi32>
    %16 = arith.select %13, %15, %4 : vector<8x256xi1>, vector<8x256xi32>
    %cst = arith.constant 0.000000e+00 : f32
    %17 = vector.broadcast %cst : f32 to vector<8x256xf32>
    %cst_3 = arith.constant 0.000000e+00 : f32
    %18 = vector.broadcast %cst_3 : f32 to vector<8x256xf32>
    %c0 = arith.constant 0 : index
    %c0_4 = arith.constant 0 : index
    %c0_5 = arith.constant 0 : index
    %19 = vector.load %arg1[%c0, %c0_4, %c0_5] : memref<1x4x290xf32, #tpu.memory_space<vmem>>, vector<1x4x256xf32>
    %20 = vector.shape_cast %19 : vector<1x4x256xf32> to vector<4x256xf32>
    %c0_6 = arith.constant 0 : index
    %c0_7 = arith.constant 0 : index
    %c0_8 = arith.constant 0 : index
    %c0_9 = arith.constant 0 : index
    %21 = vector.load %arg2[%c0_6, %c0_7, %c0_8, %c0_9] : memref<3x3x8x4xf32, #tpu.memory_space<vmem>>, vector<1x1x8x4xf32>
    %22 = vector.shape_cast %21 : vector<1x1x8x4xf32> to vector<8x4xf32>
    %cst_10 = arith.constant dense<0.000000e+00> : vector<8x256xf32>
    %23 = tpu.matmul %22, %20, %cst_10 {dimension_numbers = #tpu.dot_dimension_numbers<[1], [0], [0], [1], [0, 0, 1, 1], [], []>} : vector<8x4xf32>, vector<4x256xf32>, vector<8x256xf32> -> vector<8x256xf32>
    %24 = arith.addf %18, %23 : vector<8x256xf32>
    %c0_11 = arith.constant 0 : index
    %c0_12 = arith.constant 0 : index
    %c16 = arith.constant 16 : index
    %25 = vector.load %arg1[%c0_11, %c0_12, %c16] : memref<1x4x290xf32, #tpu.memory_space<vmem>>, vector<1x4x256xf32>
    %26 = vector.shape_cast %25 : vector<1x4x256xf32> to vector<4x256xf32>
    %c1 = arith.constant 1 : index
    %c0_13 = arith.constant 0 : index
    %c0_14 = arith.constant 0 : index
    %c0_15 = arith.constant 0 : index
    %27 = vector.load %arg2[%c1, %c0_13, %c0_14, %c0_15] : memref<3x3x8x4xf32, #tpu.memory_space<vmem>>, vector<1x1x8x4xf32>
    %28 = vector.shape_cast %27 : vector<1x1x8x4xf32> to vector<8x4xf32>
    %cst_16 = arith.constant dense<0.000000e+00> : vector<8x256xf32>
    %29 = tpu.matmul %28, %26, %cst_16 {dimension_numbers = #tpu.dot_dimension_numbers<[1], [0], [0], [1], [0, 0, 1, 1], [], []>} : vector<8x4xf32>, vector<4x256xf32>, vector<8x256xf32> -> vector<8x256xf32>
    %30 = arith.addf %24, %29 : vector<8x256xf32>
    %c0_17 = arith.constant 0 : index
    %c0_18 = arith.constant 0 : index
    %c32 = arith.constant 32 : index
    %31 = vector.load %arg1[%c0_17, %c0_18, %c32] : memref<1x4x290xf32, #tpu.memory_space<vmem>>, vector<1x4x256xf32>
    %32 = vector.shape_cast %31 : vector<1x4x256xf32> to vector<4x256xf32>
    %c2 = arith.constant 2 : index
    %c0_19 = arith.constant 0 : index
    %c0_20 = arith.constant 0 : index
    %c0_21 = arith.constant 0 : index
    %33 = vector.load %arg2[%c2, %c0_19, %c0_20, %c0_21] : memref<3x3x8x4xf32, #tpu.memory_space<vmem>>, vector<1x1x8x4xf32>
    %34 = vector.shape_cast %33 : vector<1x1x8x4xf32> to vector<8x4xf32>
    %cst_22 = arith.constant dense<0.000000e+00> : vector<8x256xf32>
    %35 = tpu.matmul %34, %32, %cst_22 {dimension_numbers = #tpu.dot_dimension_numbers<[1], [0], [0], [1], [0, 0, 1, 1], [], []>} : vector<8x4xf32>, vector<4x256xf32>, vector<8x256xf32> -> vector<8x256xf32>
    %36 = arith.addf %30, %35 : vector<8x256xf32>
    %c0_i32_23 = arith.constant 0 : i32
    %37 = vector.broadcast %c0_i32_23 : i32 to vector<8x256xi32>
    %38 = arith.cmpi sgt, %16, %37 : vector<8x256xi32>
    %cst_24 = arith.constant 0.000000e+00 : f32
    %39 = vector.broadcast %cst_24 : f32 to vector<8x256xf32>
    %40 = arith.select %38, %36, %39 : vector<8x256xi1>, vector<8x256xf32>
    %41 = arith.addf %17, %40 : vector<8x256xf32>
    %cst_25 = arith.constant 0.000000e+00 : f32
    %42 = vector.broadcast %cst_25 : f32 to vector<8x256xf32>
    %c0_26 = arith.constant 0 : index
    %c0_27 = arith.constant 0 : index
    %c1_28 = arith.constant 1 : index
    %43 = vector.load %arg1[%c0_26, %c0_27, %c1_28] : memref<1x4x290xf32, #tpu.memory_space<vmem>>, vector<1x4x256xf32>
    %44 = vector.shape_cast %43 : vector<1x4x256xf32> to vector<4x256xf32>
    %c0_29 = arith.constant 0 : index
    %c1_30 = arith.constant 1 : index
    %c0_31 = arith.constant 0 : index
    %c0_32 = arith.constant 0 : index
    %45 = vector.load %arg2[%c0_29, %c1_30, %c0_31, %c0_32] : memref<3x3x8x4xf32, #tpu.memory_space<vmem>>, vector<1x1x8x4xf32>
    %46 = vector.shape_cast %45 : vector<1x1x8x4xf32> to vector<8x4xf32>
    %cst_33 = arith.constant dense<0.000000e+00> : vector<8x256xf32>
    %47 = tpu.matmul %46, %44, %cst_33 {dimension_numbers = #tpu.dot_dimension_numbers<[1], [0], [0], [1], [0, 0, 1, 1], [], []>} : vector<8x4xf32>, vector<4x256xf32>, vector<8x256xf32> -> vector<8x256xf32>
    %48 = arith.addf %42, %47 : vector<8x256xf32>
    %c0_34 = arith.constant 0 : index
    %c0_35 = arith.constant 0 : index
    %c17 = arith.constant 17 : index
    %49 = vector.load %arg1[%c0_34, %c0_35, %c17] : memref<1x4x290xf32, #tpu.memory_space<vmem>>, vector<1x4x256xf32>
    %50 = vector.shape_cast %49 : vector<1x4x256xf32> to vector<4x256xf32>
    %c1_36 = arith.constant 1 : index
    %c1_37 = arith.constant 1 : index
    %c0_38 = arith.constant 0 : index
    %c0_39 = arith.constant 0 : index
    %51 = vector.load %arg2[%c1_36, %c1_37, %c0_38, %c0_39] : memref<3x3x8x4xf32, #tpu.memory_space<vmem>>, vector<1x1x8x4xf32>
    %52 = vector.shape_cast %51 : vector<1x1x8x4xf32> to vector<8x4xf32>
    %cst_40 = arith.constant dense<0.000000e+00> : vector<8x256xf32>
    %53 = tpu.matmul %52, %50, %cst_40 {dimension_numbers = #tpu.dot_dimension_numbers<[1], [0], [0], [1], [0, 0, 1, 1], [], []>} : vector<8x4xf32>, vector<4x256xf32>, vector<8x256xf32> -> vector<8x256xf32>
    %54 = arith.addf %48, %53 : vector<8x256xf32>
    %c0_41 = arith.constant 0 : index
    %c0_42 = arith.constant 0 : index
    %c33 = arith.constant 33 : index
    %55 = vector.load %arg1[%c0_41, %c0_42, %c33] : memref<1x4x290xf32, #tpu.memory_space<vmem>>, vector<1x4x256xf32>
    %56 = vector.shape_cast %55 : vector<1x4x256xf32> to vector<4x256xf32>
    %c2_43 = arith.constant 2 : index
    %c1_44 = arith.constant 1 : index
    %c0_45 = arith.constant 0 : index
    %c0_46 = arith.constant 0 : index
    %57 = vector.load %arg2[%c2_43, %c1_44, %c0_45, %c0_46] : memref<3x3x8x4xf32, #tpu.memory_space<vmem>>, vector<1x1x8x4xf32>
    %58 = vector.shape_cast %57 : vector<1x1x8x4xf32> to vector<8x4xf32>
    %cst_47 = arith.constant dense<0.000000e+00> : vector<8x256xf32>
    %59 = tpu.matmul %58, %56, %cst_47 {dimension_numbers = #tpu.dot_dimension_numbers<[1], [0], [0], [1], [0, 0, 1, 1], [], []>} : vector<8x4xf32>, vector<4x256xf32>, vector<8x256xf32> -> vector<8x256xf32>
    %60 = arith.addf %54, %59 : vector<8x256xf32>
    %61 = arith.addf %41, %60 : vector<8x256xf32>
    %cst_48 = arith.constant 0.000000e+00 : f32
    %62 = vector.broadcast %cst_48 : f32 to vector<8x256xf32>
    %c0_49 = arith.constant 0 : index
    %c0_50 = arith.constant 0 : index
    %c2_51 = arith.constant 2 : index
    %63 = vector.load %arg1[%c0_49, %c0_50, %c2_51] : memref<1x4x290xf32, #tpu.memory_space<vmem>>, vector<1x4x256xf32>
    %64 = vector.shape_cast %63 : vector<1x4x256xf32> to vector<4x256xf32>
    %c0_52 = arith.constant 0 : index
    %c2_53 = arith.constant 2 : index
    %c0_54 = arith.constant 0 : index
    %c0_55 = arith.constant 0 : index
    %65 = vector.load %arg2[%c0_52, %c2_53, %c0_54, %c0_55] : memref<3x3x8x4xf32, #tpu.memory_space<vmem>>, vector<1x1x8x4xf32>
    %66 = vector.shape_cast %65 : vector<1x1x8x4xf32> to vector<8x4xf32>
    %cst_56 = arith.constant dense<0.000000e+00> : vector<8x256xf32>
    %67 = tpu.matmul %66, %64, %cst_56 {dimension_numbers = #tpu.dot_dimension_numbers<[1], [0], [0], [1], [0, 0, 1, 1], [], []>} : vector<8x4xf32>, vector<4x256xf32>, vector<8x256xf32> -> vector<8x256xf32>
    %68 = arith.addf %62, %67 : vector<8x256xf32>
    %c0_57 = arith.constant 0 : index
    %c0_58 = arith.constant 0 : index
    %c18 = arith.constant 18 : index
    %69 = vector.load %arg1[%c0_57, %c0_58, %c18] : memref<1x4x290xf32, #tpu.memory_space<vmem>>, vector<1x4x256xf32>
    %70 = vector.shape_cast %69 : vector<1x4x256xf32> to vector<4x256xf32>
    %c1_59 = arith.constant 1 : index
    %c2_60 = arith.constant 2 : index
    %c0_61 = arith.constant 0 : index
    %c0_62 = arith.constant 0 : index
    %71 = vector.load %arg2[%c1_59, %c2_60, %c0_61, %c0_62] : memref<3x3x8x4xf32, #tpu.memory_space<vmem>>, vector<1x1x8x4xf32>
    %72 = vector.shape_cast %71 : vector<1x1x8x4xf32> to vector<8x4xf32>
    %cst_63 = arith.constant dense<0.000000e+00> : vector<8x256xf32>
    %73 = tpu.matmul %72, %70, %cst_63 {dimension_numbers = #tpu.dot_dimension_numbers<[1], [0], [0], [1], [0, 0, 1, 1], [], []>} : vector<8x4xf32>, vector<4x256xf32>, vector<8x256xf32> -> vector<8x256xf32>
    %74 = arith.addf %68, %73 : vector<8x256xf32>
    %c0_64 = arith.constant 0 : index
    %c0_65 = arith.constant 0 : index
    %c34 = arith.constant 34 : index
    %75 = vector.load %arg1[%c0_64, %c0_65, %c34] : memref<1x4x290xf32, #tpu.memory_space<vmem>>, vector<1x4x256xf32>
    %76 = vector.shape_cast %75 : vector<1x4x256xf32> to vector<4x256xf32>
    %c2_66 = arith.constant 2 : index
    %c2_67 = arith.constant 2 : index
    %c0_68 = arith.constant 0 : index
    %c0_69 = arith.constant 0 : index
    %77 = vector.load %arg2[%c2_66, %c2_67, %c0_68, %c0_69] : memref<3x3x8x4xf32, #tpu.memory_space<vmem>>, vector<1x1x8x4xf32>
    %78 = vector.shape_cast %77 : vector<1x1x8x4xf32> to vector<8x4xf32>
    %cst_70 = arith.constant dense<0.000000e+00> : vector<8x256xf32>
    %79 = tpu.matmul %78, %76, %cst_70 {dimension_numbers = #tpu.dot_dimension_numbers<[1], [0], [0], [1], [0, 0, 1, 1], [], []>} : vector<8x4xf32>, vector<4x256xf32>, vector<8x256xf32> -> vector<8x256xf32>
    %80 = arith.addf %74, %79 : vector<8x256xf32>
    %c15_i32 = arith.constant 15 : i32
    %81 = vector.broadcast %c15_i32 : i32 to vector<8x256xi32>
    %82 = arith.cmpi slt, %16, %81 : vector<8x256xi32>
    %cst_71 = arith.constant 0.000000e+00 : f32
    %83 = vector.broadcast %cst_71 : f32 to vector<8x256xf32>
    %84 = arith.select %82, %80, %83 : vector<8x256xi1>, vector<8x256xf32>
    %85 = arith.addf %61, %84 : vector<8x256xf32>
    %c0_72 = arith.constant 0 : index
    %c0_73 = arith.constant 0 : index
    %86 = vector.load %arg3[%c0_72, %c0_73] : memref<8x1xf32, #tpu.memory_space<vmem>>, vector<8x1xf32>
    %87 = vector.broadcast %86 : vector<8x1xf32> to vector<8x256xf32>
    %88 = arith.addf %85, %87 : vector<8x256xf32>
    %cst_74 = arith.constant 0.000000e+00 : f32
    %89 = vector.broadcast %cst_74 : f32 to vector<8x256xf32>
    %90 = arith.maximumf %88, %89 : vector<8x256xf32>
    %c0_75 = arith.constant 0 : index
    %c0_76 = arith.constant 0 : index
    %c0_77 = arith.constant 0 : index
    %91 = vector.load %arg4[%c0_75, %c0_76, %c0_77] : memref<1x8x256xf32, #tpu.memory_space<vmem>>, vector<1x8x256xf32>
    %92 = vector.shape_cast %91 : vector<1x8x256xf32> to vector<8x256xf32>
    %93 = vector.shape_cast %90 : vector<8x256xf32> to vector<1x8x256xf32>
    tpu.vector_store %arg4[%c0_75, %c0_76, %c0_77], %93 {strides = array<i32>} : memref<1x8x256xf32, #tpu.memory_space<vmem>>, vector<1x8x256xf32>,
    return
  }
  func.func @transform_0(%arg0: i32) -> (i32, i32, i32) {
    %c0_i32 = arith.constant 0 : i32
    %c0_i32_0 = arith.constant 0 : i32
    %c0_i32_1 = arith.constant 0 : i32
    return %arg0, %c0_i32, %c0_i32_0 : i32, i32, i32
  }
  func.func @transform_1(%arg0: i32) -> (i32, i32, i32, i32) {
    %c0_i32 = arith.constant 0 : i32
    %c0_i32_0 = arith.constant 0 : i32
    %c0_i32_1 = arith.constant 0 : i32
    %c0_i32_2 = arith.constant 0 : i32
    %c0_i32_3 = arith.constant 0 : i32
    return %c0_i32, %c0_i32_0, %c0_i32_1, %c0_i32_2 : i32, i32, i32, i32
  }
  func.func @transform_2(%arg0: i32) -> (i32, i32) {
    %c0_i32 = arith.constant 0 : i32
    %c0_i32_0 = arith.constant 0 : i32
    %c0_i32_1 = arith.constant 0 : i32
    return %c0_i32, %c0_i32_0 : i32, i32
  }
  func.func @transform_3(%arg0: i32) -> (i32, i32, i32) {
    %c0_i32 = arith.constant 0 : i32
    %c0_i32_0 = arith.constant 0 : i32
    %c0_i32_1 = arith.constant 0 : i32
    return %arg0, %c0_i32, %c0_i32_0 : i32, i32, i32
  }
}

</mosaic_0001>

<llo_original>
// kernel: inconv_forward.1
$region0: #{inconv_forward.1}
  #allocation0 [shape = 'u32[]', space=smem, size = 0x4, offset = 0x4, fixed_abs, tag = 'smem constant byte address 0x4 - core index']
  #allocation1 [shape = 'u32[72,128]{1,0:T(1,128)}', space=vmem, size = 0x9000, scoped, tag = 'internal scratch']
  %s0 = inlined_call_operand.vmem [shape: f32[2,4,290], index: 0, kind: input, shape index: {}]
  %s1 = inlined_call_operand.vmem [shape: f32[3,3,8,4], index: 1, kind: input, shape index: {}]
  %s2 = inlined_call_operand.vmem [shape: f32[8,1], index: 2, kind: input, shape index: {}]
  %s3 = inlined_call_operand.vmem [shape: f32[2,8,256], index: 3, kind: output, shape index: {}]
  %s4 = sld [smem:[#allocation0]]
  $region45: #{inconv_forward.1} parent=0
    _
  %s6 = ssub.s32 1, %s4
  %s7 = scalar_select 0, %s6, %s4
  loop: start=0, step=1, limit=4
  $region2: #{inconv_forward.1} parent=0 // loop_pre_header
    _
  $region3: #{inconv_forward.1} parent=0 // loop_header
    %s9 = sphi 0, %s13
    %p10 = scmp.ge.s32.totalorder %s9, 4
    %s19 = sphi 0, %s21
    %s22 = sphi 0, %s19
    %s23 = sphi 0, %s22
    %s39 = sphi 0, %s23
    %s43 = sphi 0, %s43
    %s45 = sphi 0, %s43
    %s46 = sphi 0, %s45
    %s60 = sphi 0, %s46
    %s64 = sphi 0, %s64
    %s66 = sphi 0, %s64
    %s67 = sphi 0, %s66
    %s81 = sphi 0, %s67
    %s87 = sphi 0, %s89
    %s90 = sphi 0, %s87
    %s91 = sphi 0, %s90
    %s107 = sphi 0, %s91
  $region4: #{inconv_forward.1} parent=0 // loop_header_branch
    %12 = sbr.rel (%p10) target = $region8
  $region5: #{inconv_forward.1} parent=0 // loop_body
    %s14 = ssub.s32 %s9, 1
    %s15 = ssub.s32 %s9, 2
    %s16 = sadd.s32 %s9, 1
    %s17 = ssub.s32 %s9, %s16
    %p18 = scmp.eq.s32.totalorder %s17, 0
    %s20 = sadd.s32 %s19, 1
    %s21 = scalar_select %p18, %s19, %s20
    %p24 = pneg %p18
    %p25 = scmp.eq.s32.totalorder %s9, 1
    %p26 = por %p24, %p25
    %p27 = scmp.ne.s32.totalorder %s19, %s22
    %p28 = scmp.eq.s32.totalorder %s9, 0
    %p29 = por %p27, %p28
    %p30 = scmp.ne.s32.totalorder %s19, %s22
    %p31 = scmp.eq.s32.totalorder %s14, 1
    %p32 = por %p30, %p31
    %p33 = scmp.ne.s32.totalorder %s22, %s23
    %p34 = scmp.eq.s32.totalorder %s14, 0
    %p35 = por %p33, %p34
    %p36 = scmp.ne.s32.totalorder %s22, %s23
    %p37 = scmp.eq.s32.totalorder %s15, 1
    %p38 = por %p36, %p37
    %p40 = scmp.ne.s32.totalorder %s23, %s39
    %p41 = scmp.eq.s32.totalorder %s15, 0
    %p42 = por %p40, %p41
    %s44 = sadd.s32 %s43, 1
    %p47 = scmp.eq.s32.totalorder %s9, 1
    %p48 = scmp.ne.s32.totalorder %s43, %s45
    %p49 = scmp.eq.s32.totalorder %s9, 0
    %p50 = por %p48, %p49
    %p51 = scmp.ne.s32.totalorder %s43, %s45
    %p52 = scmp.eq.s32.totalorder %s14, 1
    %p53 = por %p51, %p52
    %p54 = scmp.ne.s32.totalorder %s45, %s46
    %p55 = scmp.eq.s32.totalorder %s14, 0
    %p56 = por %p54, %p55
    %p57 = scmp.ne.s32.totalorder %s45, %s46
    %p58 = scmp.eq.s32.totalorder %s15, 1
    %p59 = por %p57, %p58
    %p61 = scmp.ne.s32.totalorder %s46, %s60
    %p62 = scmp.eq.s32.totalorder %s15, 0
    %p63 = por %p61, %p62
    %s65 = sadd.s32 %s64, 1
    %p68 = scmp.eq.s32.totalorder %s9, 1
    %p69 = scmp.ne.s32.totalorder %s64, %s66
    %p70 = scmp.eq.s32.totalorder %s9, 0
    %p71 = por %p69, %p70
    %p72 = scmp.ne.s32.totalorder %s64, %s66
    %p73 = scmp.eq.s32.totalorder %s14, 1
    %p74 = por %p72, %p73
    %p75 = scmp.ne.s32.totalorder %s66, %s67
    %p76 = scmp.eq.s32.totalorder %s14, 0
    %p77 = por %p75, %p76
    %p78 = scmp.ne.s32.totalorder %s66, %s67
    %p79 = scmp.eq.s32.totalorder %s15, 1
    %p80 = por %p78, %p79
    %p82 = scmp.ne.s32.totalorder %s67, %s81
    %p83 = scmp.eq.s32.totalorder %s15, 0
    %p84 = por %p82, %p83
    %s85 = ssub.s32 %s9, %s16
    %p86 = scmp.eq.s32.totalorder %s85, 0
    %s88 = sadd.s32 %s87, 1
    %s89 = scalar_select %p86, %s87, %s88
    %p92 = pneg %p86
    %p93 = scmp.eq.s32.totalorder %s9, 1
    %p94 = por %p92, %p93
    %p95 = scmp.ne.s32.totalorder %s87, %s90
    %p96 = scmp.eq.s32.totalorder %s9, 0
    %p97 = por %p95, %p96
    %p98 = scmp.ne.s32.totalorder %s87, %s90
    %p99 = scmp.eq.s32.totalorder %s14, 1
    %p100 = por %p98, %p99
    %p101 = scmp.ne.s32.totalorder %s90, %s91
    %p102 = scmp.eq.s32.totalorder %s14, 0
    %p103 = por %p101, %p102
    %p104 = scmp.ne.s32.totalorder %s90, %s91
    %p105 = scmp.eq.s32.totalorder %s15, 1
    %p106 = por %p104, %p105
    %p108 = scmp.ne.s32.totalorder %s91, %s107
    %p109 = scmp.eq.s32.totalorder %s15, 0
    %p110 = por %p108, %p109
    %p111 = scmp.le.s32.totalorder 1, %s9
    %p112 = scmp.lt.s32.totalorder %s9, 3
    %p113 = pnand %p111, %p112
    %p114 = pneg %p113
    // Predicated region
    $region9: #{inconv_forward.1} parent=5 // pred_check
      _
    $region10: #{inconv_forward.1} parent=5 // pred_check_branch
      %116 = sbr.rel (%p113) target = $region12
    $region11: #{inconv_forward.1} parent=5 // pred_region
      %s117 = ssub.s32 %s9, 1
      // Predicated region
      $region13: #{inconv_forward.1} parent=11 // pred_check
        %p118 = pneg %p56
      $region14: #{inconv_forward.1} parent=11 // pred_check_branch
        %120 = sbr.rel (%p118) target = $region16
      $region15: #{inconv_forward.1} parent=11 // pred_region
        _
      $region16: #{inconv_forward.1} parent=11 // pred_fallthru
        _
      // Predicated region
      $region17: #{inconv_forward.1} parent=11 // pred_check
        %p121 = pneg %p77
      $region18: #{inconv_forward.1} parent=11 // pred_check_branch
        %123 = sbr.rel (%p121) target = $region20
      $region19: #{inconv_forward.1} parent=11 // pred_region
        _
      $region20: #{inconv_forward.1} parent=11 // pred_fallthru
        _
    $region12: #{inconv_forward.1} parent=5 // pred_fallthru
      _
    %p124 = scmp.lt.s32.totalorder %s9, 2
    // Predicated region
    $region21: #{inconv_forward.1} parent=5 // pred_check
      %p125 = pneg %p124
    $region22: #{inconv_forward.1} parent=5 // pred_check_branch
      %127 = sbr.rel (%p125) target = $region24
    $region23: #{inconv_forward.1} parent=5 // pred_region
      // Predicated region
      $region25: #{inconv_forward.1} parent=23 // pred_check
        %p128 = pneg %p29
      $region26: #{inconv_forward.1} parent=23 // pred_check_branch
        %130 = sbr.rel (%p128) target = $region28
      $region27: #{inconv_forward.1} parent=23 // pred_region
        %p131 = scmp.lt.s32.totalorder %s9, 1
        %s132 = scalar_select %p131, %s9, 1
        %s133 = smul.addr %s132, 3
        %s134 = smul.addr %s133, 4
        %s135 = scalar_lea.vmem %s0, %s134
      $region28: #{inconv_forward.1} parent=23 // pred_fallthru
        _
    $region24: #{inconv_forward.1} parent=5 // pred_fallthru
      _
    %p136 = scmp.le.s32.totalorder 1, %s9
    %p137 = scmp.lt.s32.totalorder %s9, 3
    %p138 = pnand %p136, %p137
    %p139 = pneg %p138
    // Predicated region
    $region29: #{inconv_forward.1} parent=5 // pred_check
      _
    $region30: #{inconv_forward.1} parent=5 // pred_check_branch
      %141 = sbr.rel (%p138) target = $region32
    $region31: #{inconv_forward.1} parent=5 // pred_region
      %s142 = ssub.s32 %s9, 1
      %p143 = scmp.lt.s32.totalorder %s14, 1
      %s144 = scalar_select %p143, %s14, 1
      %s145 = smul.addr %s144, 3
      %s146 = smul.addr %s145, 4
      %s147 = scalar_lea.vmem %s0, %s146
      %p148 = pneg %p35
      %p149 = pneg %p32
      %p150 = pneg %p56
      %p151 = pneg %p53
      %p152 = pneg %p77
      %p153 = pneg %p74
      %p154 = pneg %p103
      %p155 = pneg %p100
      %p156 = scmp.lt.s32.totalorder %s14, 1
      %s157 = scalar_select %p156, %s14, 1
      %s158 = smul.addr %s157, 2
      %s159 = smul.addr %s158, 8
      %s160 = scalar_lea.vmem %s3, %s159
      %p161 = scmp.lt.s32.totalorder %s14, 1
      %s162 = scalar_select %p161, %s14, 1
      %s163 = smul.addr %s162, 3
      %s164 = smul.addr %s163, 4
      %s165 = scalar_lea.vmem %s0, %s164
      %p166 = scmp.lt.s32.totalorder %s14, 1
      %s167 = scalar_select %p166, %s14, 1
      %s168 = smul.addr %s167, 2
      %s169 = smul.addr %s168, 8
      %s170 = scalar_lea.vmem %s3, %s169
      %v171 = vlaneseq
      %v172 = vand.u32 %v171, 127
      %v173 = vadd.s32 %v172, 128
      %vm174 = vcmp.lt.s32.totalorder %v172, 0
      %v175 = vsub.s32 0, %v172
      %v176 = vsel %vm174, %v175, %v172
      %v177 = vshrl.u32 %v176, 4
      %v178 = vand.u32 %v176, 15
      %v179 = vsub.s32 0, %v178
      %v180 = vsel %vm174, %v179, %v178
      %vm181 = vcmp.lt.s32.totalorder %v173, 0
      %v182 = vsub.s32 0, %v173
      %v183 = vsel %vm181, %v182, %v173
      %v184 = vshrl.u32 %v183, 4
      %v185 = vand.u32 %v183, 15
      %v186 = vsub.s32 0, %v185
      %v187 = vsel %vm181, %v186, %v185
      %vm188 = vcmp.ne.s32.totalorder %v180, 0
      %vm189 = vcmp.ne.s32.totalorder %v187, 0
      %vm190 = vcmp.lt.s32.totalorder %v180, 0
      %vm191 = vcmp.lt.s32.totalorder %v187, 0
      %vm192 = vmand %vm190, %vm188
      %vm193 = vmand %vm191, %vm189
      %v194 = vadd.s32 %v180, 16
      %v195 = vadd.s32 %v187, 16
      %v196 = vsel %vm192, %v194, %v180
      %v197 = vsel %vm193, %v195, %v187
      %v198 = vld [vmem:[%s165] sm:$0xff]
      %v199 = vld [vmem:[%s1] sm:$0xff]
      %v200 = vld [vmem:[%s165 + $0x8] sm:$0xf]
      %s201 = scalar_lea.vmem %s1, 24
      %v202 = vld [vmem:[%s201] sm:$0xff]
      %205 = vst [vmem:[#allocation1] ss:$2 sm:$0xff] %v198
      %s206 = scalar_lea.vmem [#allocation1], 16
      %207 = vst [vmem:[%s206] ss:$2 sm:$0xff] %v200
      %v208 = vld.sshfl [vmem:[#allocation1] sm:$0xff pattern:$0x75316420]
      %v209 = vld.sshfl [vmem:[#allocation1 + $0x8] sm:$0xff pattern:$0x75316420]
      %v210 = vld.sshfl [vmem:[#allocation1 + $0x10] sm:$0xff pattern:$0x75316420]
      %211 = vrot.lane.b32.xlu0 %v208, 112
      %v212 = vpop.permute.xlu0 %211
      %213 = vrot.lane.b32.xlu0 %v209, 112
      %v214 = vpop.permute.xlu0 %213
      %215 = vrot.lane.b32.xlu0 %v210, 112
      %v216 = vpop.permute.xlu0 %215
      %vm217 = vcmask 916480
      %v218 = vsel %vm217, %v212, %v214
      %v219 = vsel %vm217, %v214, %v216
      %vm220 = vcmask 31744
      %v222 = vsel %vm220, %v202, 0
      %vm224 = vcmask 1043456
      %v225 = vsel %vm224, %v218, 0
      %v227 = vsel %vm224, %v219, 0
      %229 = vmatpush.msra.mxu0 0.0
      %230 = vmatpush.msra.mxu0 0.0
      %231 = vmatpush.msra.mxu0 0.0
      %232 = vmatpush.msra.mxu0 0.0
      %233 = vmatpush.msra.mxu0 0.0
      %234 = vmatpush.msra.mxu0 0.0
      %235 = vmatpush.msra.mxu0 0.0
      %236 = vmatpush.msra.mxu0 0.0
      %237 = vmatpush.msra.mxu0 0.0
      %238 = vmatpush.msra.mxu0 0.0
      %239 = vmatpush.msra.mxu0 0.0
      %240 = vmatpush.msra.mxu0 0.0
      %241 = vmatpush.msra.mxu0 0.0
      %242 = vmatpush.msra.mxu0 0.0
      %243 = vmatpush.msra.mxu0 0.0
      %244 = vmatpush.msra.mxu0 %v225
      %245 = vmatmul.f32.gmra.mxu0 %v222
      %v246 = vpop.f32.mrf.mxu0
      %v247 = vadd.f32 0.0, %v246
      %248 = vdwg.mxu0
      %249 = vmatpush.msra.mxu0 0.0
      %250 = vmatpush.msra.mxu0 0.0
      %251 = vmatpush.msra.mxu0 0.0
      %252 = vmatpush.msra.mxu0 0.0
      %253 = vmatpush.msra.mxu0 0.0
      %254 = vmatpush.msra.mxu0 0.0
      %255 = vmatpush.msra.mxu0 0.0
      %256 = vmatpush.msra.mxu0 0.0
      %257 = vmatpush.msra.mxu0 0.0
      %258 = vmatpush.msra.mxu0 0.0
      %259 = vmatpush.msra.mxu0 0.0
      %260 = vmatpush.msra.mxu0 0.0
      %261 = vmatpush.msra.mxu0 0.0
      %262 = vmatpush.msra.mxu0 0.0
      %263 = vmatpush.msra.mxu0 0.0
      %264 = vmatpush.msra.mxu0 %v227
      %265 = vmatmul.f32.gmra.mxu0 %v222
      %v266 = vpop.f32.mrf.mxu0
      %v267 = vadd.f32 0.0, %v266
      %268 = vdwg.mxu0
      %269 = vst [vmem:[#allocation1] ss:$2 sm:$0xff] %v198
      %v270 = vld.sshfl [vmem:[#allocation1] sm:$0xff pattern:$0x75316420]
      %v271 = vld.sshfl [vmem:[#allocation1 + $0x8] sm:$0xff pattern:$0x75316420]
      %v273 = vsel %vm220, %v199, 0
      %v275 = vsel %vm224, %v270, 0
      %v277 = vsel %vm224, %v271, 0
      %279 = vmatpush.msra.mxu0 0.0
      %280 = vmatpush.msra.mxu0 0.0
      %281 = vmatpush.msra.mxu0 0.0
      %282 = vmatpush.msra.mxu0 0.0
      %283 = vmatpush.msra.mxu0 0.0
      %284 = vmatpush.msra.mxu0 0.0
      %285 = vmatpush.msra.mxu0 0.0
      %286 = vmatpush.msra.mxu0 0.0
      %287 = vmatpush.msra.mxu0 0.0
      %288 = vmatpush.msra.mxu0 0.0
      %289 = vmatpush.msra.mxu0 0.0
      %290 = vmatpush.msra.mxu0 0.0
      %291 = vmatpush.msra.mxu0 0.0
      %292 = vmatpush.msra.mxu0 0.0
      %293 = vmatpush.msra.mxu0 0.0
      %294 = vmatpush.msra.mxu0 %v275
      %295 = vmatmul.f32.gmra.mxu0 %v273
      %v296 = vpop.f32.mrf.mxu0
      %v297 = vadd.f32 %v247, %v296
      %298 = vdwg.mxu0
      %299 = vmatpush.msra.mxu0 0.0
      %300 = vmatpush.msra.mxu0 0.0
      %301 = vmatpush.msra.mxu0 0.0
      %302 = vmatpush.msra.mxu0 0.0
      %303 = vmatpush.msra.mxu0 0.0
      %304 = vmatpush.msra.mxu0 0.0
      %305 = vmatpush.msra.mxu0 0.0
      %306 = vmatpush.msra.mxu0 0.0
      %307 = vmatpush.msra.mxu0 0.0
      %308 = vmatpush.msra.mxu0 0.0
      %309 = vmatpush.msra.mxu0 0.0
      %310 = vmatpush.msra.mxu0 0.0
      %311 = vmatpush.msra.mxu0 0.0
      %312 = vmatpush.msra.mxu0 0.0
      %313 = vmatpush.msra.mxu0 0.0
      %314 = vmatpush.msra.mxu0 %v277
      %315 = vmatmul.f32.gmra.mxu0 %v273
      %v316 = vpop.f32.mrf.mxu0
      %v317 = vadd.f32 %v267, %v316
      %318 = vdwg.mxu0
      %v319 = vld [vmem:[%s165] sm:$0xff]
      %v320 = vld [vmem:[%s165 + $0x8] sm:$0xf]
      %s321 = scalar_lea.vmem %s1, 48
      %v322 = vld [vmem:[%s321] sm:$0xff]
      %325 = vst [vmem:[#allocation1] ss:$2 sm:$0xff] %v319
      %s326 = scalar_lea.vmem [#allocation1], 16
      %327 = vst [vmem:[%s326] ss:$2 sm:$0xff] %v320
      %v328 = vld.sshfl [vmem:[#allocation1] sm:$0xff pattern:$0x75316420]
      %v329 = vld.sshfl [vmem:[#allocation1 + $0x8] sm:$0xff pattern:$0x75316420]
      %v330 = vld.sshfl [vmem:[#allocation1 + $0x10] sm:$0xff pattern:$0x75316420]
      %331 = vrot.lane.b32.xlu0 %v328, 96
      %v332 = vpop.permute.xlu0 %331
      %333 = vrot.lane.b32.xlu0 %v329, 96
      %v334 = vpop.permute.xlu0 %333
      %335 = vrot.lane.b32.xlu0 %v330, 96
      %v336 = vpop.permute.xlu0 %335
      %vm337 = vcmask 785408
      %v338 = vsel %vm337, %v332, %v334
      %v339 = vsel %vm337, %v334, %v336
      %v341 = vsel %vm220, %v322, 0
      %v343 = vsel %vm224, %v338, 0
      %v345 = vsel %vm224, %v339, 0
      %347 = vmatpush.msra.mxu0 0.0
      %348 = vmatpush.msra.mxu0 0.0
      %349 = vmatpush.msra.mxu0 0.0
      %350 = vmatpush.msra.mxu0 0.0
      %351 = vmatpush.msra.mxu0 0.0
      %352 = vmatpush.msra.mxu0 0.0
      %353 = vmatpush.msra.mxu0 0.0
      %354 = vmatpush.msra.mxu0 0.0
      %355 = vmatpush.msra.mxu0 0.0
      %356 = vmatpush.msra.mxu0 0.0
      %357 = vmatpush.msra.mxu0 0.0
      %358 = vmatpush.msra.mxu0 0.0
      %359 = vmatpush.msra.mxu0 0.0
      %360 = vmatpush.msra.mxu0 0.0
      %361 = vmatpush.msra.mxu0 0.0
      %362 = vmatpush.msra.mxu0 %v343
      %363 = vmatmul.f32.gmra.mxu0 %v341
      %v364 = vpop.f32.mrf.mxu0
      %v365 = vadd.f32 0.0, %v364
      %366 = vdwg.mxu0
      %367 = vmatpush.msra.mxu0 0.0
      %368 = vmatpush.msra.mxu0 0.0
      %369 = vmatpush.msra.mxu0 0.0
      %370 = vmatpush.msra.mxu0 0.0
      %371 = vmatpush.msra.mxu0 0.0
      %372 = vmatpush.msra.mxu0 0.0
      %373 = vmatpush.msra.mxu0 0.0
      %374 = vmatpush.msra.mxu0 0.0
      %375 = vmatpush.msra.mxu0 0.0
      %376 = vmatpush.msra.mxu0 0.0
      %377 = vmatpush.msra.mxu0 0.0
      %378 = vmatpush.msra.mxu0 0.0
      %379 = vmatpush.msra.mxu0 0.0
      %380 = vmatpush.msra.mxu0 0.0
      %381 = vmatpush.msra.mxu0 0.0
      %382 = vmatpush.msra.mxu0 %v345
      %383 = vmatmul.f32.gmra.mxu0 %v341
      %v384 = vpop.f32.mrf.mxu0
      %v385 = vadd.f32 0.0, %v384
      %386 = vdwg.mxu0
      %v387 = vadd.f32 %v297, %v365
      %v388 = vadd.f32 %v317, %v385
      %vm389 = vcmp.gt.s32.totalorder %v196, 0
      %vm390 = vcmp.gt.s32.totalorder %v197, 0
      %v391 = vsel %vm389, %v387, 0.0
      %v392 = vsel %vm390, %v388, 0.0
      %v393 = vadd.f32 %v391, 0.0
      %v394 = vadd.f32 %v392, 0.0
      %v395 = vld [vmem:[%s165] sm:$0xff]
      %v396 = vld [vmem:[%s165 + $0x8] sm:$0xf]
      %s397 = scalar_lea.vmem %s1, 8
      %v398 = vld [vmem:[%s397] sm:$0xff]
      %s399 = scalar_lea.vmem %s1, 32
      %v400 = vld [vmem:[%s399] sm:$0xff]
      %403 = vst [vmem:[#allocation1] ss:$2 sm:$0xff] %v395
      %s404 = scalar_lea.vmem [#allocation1], 16
      %405 = vst [vmem:[%s404] ss:$2 sm:$0xff] %v396
      %v406 = vld.sshfl [vmem:[#allocation1] sm:$0xff pattern:$0x75316420]
      %v407 = vld.sshfl [vmem:[#allocation1 + $0x8] sm:$0xff pattern:$0x75316420]
      %v408 = vld.sshfl [vmem:[#allocation1 + $0x10] sm:$0xff pattern:$0x75316420]
      %409 = vrot.lane.b32.xlu0 %v406, 111
      %v410 = vpop.permute.xlu0 %409
      %411 = vrot.lane.b32.xlu0 %v407, 111
      %v412 = vpop.permute.xlu0 %411
      %413 = vrot.lane.b32.xlu0 %v408, 111
      %v414 = vpop.permute.xlu0 %413
      %vm415 = vcmask 908288
      %v416 = vsel %vm415, %v410, %v412
      %v417 = vsel %vm415, %v412, %v414
      %v419 = vsel %vm220, %v400, 0
      %v421 = vsel %vm224, %v416, 0
      %v423 = vsel %vm224, %v417, 0
      %425 = vmatpush.msra.mxu0 0.0
      %426 = vmatpush.msra.mxu0 0.0
      %427 = vmatpush.msra.mxu0 0.0
      %428 = vmatpush.msra.mxu0 0.0
      %429 = vmatpush.msra.mxu0 0.0
      %430 = vmatpush.msra.mxu0 0.0
      %431 = vmatpush.msra.mxu0 0.0
      %432 = vmatpush.msra.mxu0 0.0
      %433 = vmatpush.msra.mxu0 0.0
      %434 = vmatpush.msra.mxu0 0.0
      %435 = vmatpush.msra.mxu0 0.0
      %436 = vmatpush.msra.mxu0 0.0
      %437 = vmatpush.msra.mxu0 0.0
      %438 = vmatpush.msra.mxu0 0.0
      %439 = vmatpush.msra.mxu0 0.0
      %440 = vmatpush.msra.mxu0 %v421
      %441 = vmatmul.f32.gmra.mxu0 %v419
      %v442 = vpop.f32.mrf.mxu0
      %v443 = vadd.f32 0.0, %v442
      %444 = vdwg.mxu0
      %445 = vmatpush.msra.mxu0 0.0
      %446 = vmatpush.msra.mxu0 0.0
      %447 = vmatpush.msra.mxu0 0.0
      %448 = vmatpush.msra.mxu0 0.0
      %449 = vmatpush.msra.mxu0 0.0
      %450 = vmatpush.msra.mxu0 0.0
      %451 = vmatpush.msra.mxu0 0.0
      %452 = vmatpush.msra.mxu0 0.0
      %453 = vmatpush.msra.mxu0 0.0
      %454 = vmatpush.msra.mxu0 0.0
      %455 = vmatpush.msra.mxu0 0.0
      %456 = vmatpush.msra.mxu0 0.0
      %457 = vmatpush.msra.mxu0 0.0
      %458 = vmatpush.msra.mxu0 0.0
      %459 = vmatpush.msra.mxu0 0.0
      %460 = vmatpush.msra.mxu0 %v423
      %461 = vmatmul.f32.gmra.mxu0 %v419
      %v462 = vpop.f32.mrf.mxu0
      %v463 = vadd.f32 0.0, %v462
      %464 = vdwg.mxu0
      %465 = vst [vmem:[#allocation1] ss:$2 sm:$0xff] %v395
      %s466 = scalar_lea.vmem [#allocation1], 16
      %467 = vst [vmem:[%s466] ss:$2 sm:$0xff] %v396
      %v468 = vld.sshfl [vmem:[#allocation1] sm:$0xff pattern:$0x75316420]
      %v469 = vld.sshfl [vmem:[#allocation1 + $0x8] sm:$0xff pattern:$0x75316420]
      %v470 = vld.sshfl [vmem:[#allocation1 + $0x10] sm:$0xff pattern:$0x75316420]
      %471 = vrot.lane.b32.xlu0 %v468, 127
      %v472 = vpop.permute.xlu0 %471
      %473 = vrot.lane.b32.xlu0 %v469, 127
      %v474 = vpop.permute.xlu0 %473
      %475 = vrot.lane.b32.xlu0 %v470, 127
      %v476 = vpop.permute.xlu0 %475
      %vm477 = vcmask 1039360
      %v478 = vsel %vm477, %v472, %v474
      %v479 = vsel %vm477, %v474, %v476
      %v481 = vsel %vm220, %v398, 0
      %v483 = vsel %vm224, %v478, 0
      %v485 = vsel %vm224, %v479, 0
      %487 = vmatpush.msra.mxu0 0.0
      %488 = vmatpush.msra.mxu0 0.0
      %489 = vmatpush.msra.mxu0 0.0
      %490 = vmatpush.msra.mxu0 0.0
      %491 = vmatpush.msra.mxu0 0.0
      %492 = vmatpush.msra.mxu0 0.0
      %493 = vmatpush.msra.mxu0 0.0
      %494 = vmatpush.msra.mxu0 0.0
      %495 = vmatpush.msra.mxu0 0.0
      %496 = vmatpush.msra.mxu0 0.0
      %497 = vmatpush.msra.mxu0 0.0
      %498 = vmatpush.msra.mxu0 0.0
      %499 = vmatpush.msra.mxu0 0.0
      %500 = vmatpush.msra.mxu0 0.0
      %501 = vmatpush.msra.mxu0 0.0
      %502 = vmatpush.msra.mxu0 %v483
      %503 = vmatmul.f32.gmra.mxu0 %v481
      %v504 = vpop.f32.mrf.mxu0
      %v505 = vadd.f32 %v443, %v504
      %506 = vdwg.mxu0
      %507 = vmatpush.msra.mxu0 0.0
      %508 = vmatpush.msra.mxu0 0.0
      %509 = vmatpush.msra.mxu0 0.0
      %510 = vmatpush.msra.mxu0 0.0
      %511 = vmatpush.msra.mxu0 0.0
      %512 = vmatpush.msra.mxu0 0.0
      %513 = vmatpush.msra.mxu0 0.0
      %514 = vmatpush.msra.mxu0 0.0
      %515 = vmatpush.msra.mxu0 0.0
      %516 = vmatpush.msra.mxu0 0.0
      %517 = vmatpush.msra.mxu0 0.0
      %518 = vmatpush.msra.mxu0 0.0
      %519 = vmatpush.msra.mxu0 0.0
      %520 = vmatpush.msra.mxu0 0.0
      %521 = vmatpush.msra.mxu0 0.0
      %522 = vmatpush.msra.mxu0 %v485
      %523 = vmatmul.f32.gmra.mxu0 %v481
      %v524 = vpop.f32.mrf.mxu0
      %v525 = vadd.f32 %v463, %v524
      %526 = vdwg.mxu0
      %v527 = vld [vmem:[%s165] sm:$0xff]
      %v528 = vld [vmem:[%s165 + $0x8] sm:$0xf]
      %s529 = scalar_lea.vmem %s1, 56
      %v530 = vld [vmem:[%s529] sm:$0xff]
      %533 = vst [vmem:[#allocation1] ss:$2 sm:$0xff] %v527
      %s534 = scalar_lea.vmem [#allocation1], 16
      %535 = vst [vmem:[%s534] ss:$2 sm:$0xff] %v528
      %v536 = vld.sshfl [vmem:[#allocation1] sm:$0xff pattern:$0x75316420]
      %v537 = vld.sshfl [vmem:[#allocation1 + $0x8] sm:$0xff pattern:$0x75316420]
      %v538 = vld.sshfl [vmem:[#allocation1 + $0x10] sm:$0xff pattern:$0x75316420]
      %539 = vrot.lane.b32.xlu0 %v536, 95
      %v540 = vpop.permute.xlu0 %539
      %541 = vrot.lane.b32.xlu0 %v537, 95
      %v542 = vpop.permute.xlu0 %541
      %543 = vrot.lane.b32.xlu0 %v538, 95
      %v544 = vpop.permute.xlu0 %543
      %vm545 = vcmask 777216
      %v546 = vsel %vm545, %v540, %v542
      %v547 = vsel %vm545, %v542, %v544
      %v549 = vsel %vm220, %v530, 0
      %v551 = vsel %vm224, %v546, 0
      %v553 = vsel %vm224, %v547, 0
      %555 = vmatpush.msra.mxu0 0.0
      %556 = vmatpush.msra.mxu0 0.0
      %557 = vmatpush.msra.mxu0 0.0
      %558 = vmatpush.msra.mxu0 0.0
      %559 = vmatpush.msra.mxu0 0.0
      %560 = vmatpush.msra.mxu0 0.0
      %561 = vmatpush.msra.mxu0 0.0
      %562 = vmatpush.msra.mxu0 0.0
      %563 = vmatpush.msra.mxu0 0.0
      %564 = vmatpush.msra.mxu0 0.0
      %565 = vmatpush.msra.mxu0 0.0
      %566 = vmatpush.msra.mxu0 0.0
      %567 = vmatpush.msra.mxu0 0.0
      %568 = vmatpush.msra.mxu0 0.0
      %569 = vmatpush.msra.mxu0 0.0
      %570 = vmatpush.msra.mxu0 %v551
      %571 = vmatmul.f32.gmra.mxu0 %v549
      %v572 = vpop.f32.mrf.mxu0
      %v573 = vadd.f32 0.0, %v572
      %574 = vdwg.mxu0
      %575 = vmatpush.msra.mxu0 0.0
      %576 = vmatpush.msra.mxu0 0.0
      %577 = vmatpush.msra.mxu0 0.0
      %578 = vmatpush.msra.mxu0 0.0
      %579 = vmatpush.msra.mxu0 0.0
      %580 = vmatpush.msra.mxu0 0.0
      %581 = vmatpush.msra.mxu0 0.0
      %582 = vmatpush.msra.mxu0 0.0
      %583 = vmatpush.msra.mxu0 0.0
      %584 = vmatpush.msra.mxu0 0.0
      %585 = vmatpush.msra.mxu0 0.0
      %586 = vmatpush.msra.mxu0 0.0
      %587 = vmatpush.msra.mxu0 0.0
      %588 = vmatpush.msra.mxu0 0.0
      %589 = vmatpush.msra.mxu0 0.0
      %590 = vmatpush.msra.mxu0 %v553
      %591 = vmatmul.f32.gmra.mxu0 %v549
      %v592 = vpop.f32.mrf.mxu0
      %v593 = vadd.f32 0.0, %v592
      %594 = vdwg.mxu0
      %v595 = vadd.f32 %v505, %v573
      %v596 = vadd.f32 %v525, %v593
      %v597 = vadd.f32 %v393, %v595
      %v598 = vadd.f32 %v394, %v596
      %v599 = vld [vmem:[%s165] sm:$0xff]
      %v600 = vld [vmem:[%s165 + $0x8] sm:$0xf]
      %s601 = scalar_lea.vmem %s1, 16
      %v602 = vld [vmem:[%s601] sm:$0xff]
      %s603 = scalar_lea.vmem %s1, 40
      %v604 = vld [vmem:[%s603] sm:$0xff]
      %607 = vst [vmem:[#allocation1] ss:$2 sm:$0xff] %v599
      %s608 = scalar_lea.vmem [#allocation1], 16
      %609 = vst [vmem:[%s608] ss:$2 sm:$0xff] %v600
      %v610 = vld.sshfl [vmem:[#allocation1] sm:$0xff pattern:$0x75316420]
      %v611 = vld.sshfl [vmem:[#allocation1 + $0x8] sm:$0xff pattern:$0x75316420]
      %v612 = vld.sshfl [vmem:[#allocation1 + $0x10] sm:$0xff pattern:$0x75316420]
      %613 = vrot.lane.b32.xlu0 %v610, 110
      %v614 = vpop.permute.xlu0 %613
      %615 = vrot.lane.b32.xlu0 %v611, 110
      %v616 = vpop.permute.xlu0 %615
      %617 = vrot.lane.b32.xlu0 %v612, 110
      %v618 = vpop.permute.xlu0 %617
      %vm619 = vcmask 900096
      %v620 = vsel %vm619, %v614, %v616
      %v621 = vsel %vm619, %v616, %v618
      %v623 = vsel %vm220, %v604, 0
      %v625 = vsel %vm224, %v620, 0
      %v627 = vsel %vm224, %v621, 0
      %629 = vmatpush.msra.mxu0 0.0
      %630 = vmatpush.msra.mxu0 0.0
      %631 = vmatpush.msra.mxu0 0.0
      %632 = vmatpush.msra.mxu0 0.0
      %633 = vmatpush.msra.mxu0 0.0
      %634 = vmatpush.msra.mxu0 0.0
      %635 = vmatpush.msra.mxu0 0.0
      %636 = vmatpush.msra.mxu0 0.0
      %637 = vmatpush.msra.mxu0 0.0
      %638 = vmatpush.msra.mxu0 0.0
      %639 = vmatpush.msra.mxu0 0.0
      %640 = vmatpush.msra.mxu0 0.0
      %641 = vmatpush.msra.mxu0 0.0
      %642 = vmatpush.msra.mxu0 0.0
      %643 = vmatpush.msra.mxu0 0.0
      %644 = vmatpush.msra.mxu0 %v625
      %645 = vmatmul.f32.gmra.mxu0 %v623
      %v646 = vpop.f32.mrf.mxu0
      %v647 = vadd.f32 0.0, %v646
      %648 = vdwg.mxu0
      %649 = vmatpush.msra.mxu0 0.0
      %650 = vmatpush.msra.mxu0 0.0
      %651 = vmatpush.msra.mxu0 0.0
      %652 = vmatpush.msra.mxu0 0.0
      %653 = vmatpush.msra.mxu0 0.0
      %654 = vmatpush.msra.mxu0 0.0
      %655 = vmatpush.msra.mxu0 0.0
      %656 = vmatpush.msra.mxu0 0.0
      %657 = vmatpush.msra.mxu0 0.0
      %658 = vmatpush.msra.mxu0 0.0
      %659 = vmatpush.msra.mxu0 0.0
      %660 = vmatpush.msra.mxu0 0.0
      %661 = vmatpush.msra.mxu0 0.0
      %662 = vmatpush.msra.mxu0 0.0
      %663 = vmatpush.msra.mxu0 0.0
      %664 = vmatpush.msra.mxu0 %v627
      %665 = vmatmul.f32.gmra.mxu0 %v623
      %v666 = vpop.f32.mrf.mxu0
      %v667 = vadd.f32 0.0, %v666
      %668 = vdwg.mxu0
      %669 = vst [vmem:[#allocation1] ss:$2 sm:$0xff] %v599
      %s670 = scalar_lea.vmem [#allocation1], 16
      %671 = vst [vmem:[%s670] ss:$2 sm:$0xff] %v600
      %v672 = vld.sshfl [vmem:[#allocation1] sm:$0xff pattern:$0x75316420]
      %v673 = vld.sshfl [vmem:[#allocation1 + $0x8] sm:$0xff pattern:$0x75316420]
      %v674 = vld.sshfl [vmem:[#allocation1 + $0x10] sm:$0xff pattern:$0x75316420]
      %675 = vrot.lane.b32.xlu0 %v672, 126
      %v676 = vpop.permute.xlu0 %675
      %677 = vrot.lane.b32.xlu0 %v673, 126
      %v678 = vpop.permute.xlu0 %677
      %679 = vrot.lane.b32.xlu0 %v674, 126
      %v680 = vpop.permute.xlu0 %679
      %vm681 = vcmask 1031168
      %v682 = vsel %vm681, %v676, %v678
      %v683 = vsel %vm681, %v678, %v680
      %v685 = vsel %vm220, %v602, 0
      %v687 = vsel %vm224, %v682, 0
      %v689 = vsel %vm224, %v683, 0
      %691 = vmatpush.msra.mxu0 0.0
      %692 = vmatpush.msra.mxu0 0.0
      %693 = vmatpush.msra.mxu0 0.0
      %694 = vmatpush.msra.mxu0 0.0
      %695 = vmatpush.msra.mxu0 0.0
      %696 = vmatpush.msra.mxu0 0.0
      %697 = vmatpush.msra.mxu0 0.0
      %698 = vmatpush.msra.mxu0 0.0
      %699 = vmatpush.msra.mxu0 0.0
      %700 = vmatpush.msra.mxu0 0.0
      %701 = vmatpush.msra.mxu0 0.0
      %702 = vmatpush.msra.mxu0 0.0
      %703 = vmatpush.msra.mxu0 0.0
      %704 = vmatpush.msra.mxu0 0.0
      %705 = vmatpush.msra.mxu0 0.0
      %706 = vmatpush.msra.mxu0 %v687
      %707 = vmatmul.f32.gmra.mxu0 %v685
      %v708 = vpop.f32.mrf.mxu0
      %v709 = vadd.f32 %v647, %v708
      %710 = vdwg.mxu0
      %711 = vmatpush.msra.mxu0 0.0
      %712 = vmatpush.msra.mxu0 0.0
      %713 = vmatpush.msra.mxu0 0.0
      %714 = vmatpush.msra.mxu0 0.0
      %715 = vmatpush.msra.mxu0 0.0
      %716 = vmatpush.msra.mxu0 0.0
      %717 = vmatpush.msra.mxu0 0.0
      %718 = vmatpush.msra.mxu0 0.0
      %719 = vmatpush.msra.mxu0 0.0
      %720 = vmatpush.msra.mxu0 0.0
      %721 = vmatpush.msra.mxu0 0.0
      %722 = vmatpush.msra.mxu0 0.0
      %723 = vmatpush.msra.mxu0 0.0
      %724 = vmatpush.msra.mxu0 0.0
      %725 = vmatpush.msra.mxu0 0.0
      %726 = vmatpush.msra.mxu0 %v689
      %727 = vmatmul.f32.gmra.mxu0 %v685
      %v728 = vpop.f32.mrf.mxu0
      %v729 = vadd.f32 %v667, %v728
      %730 = vdwg.mxu0
      %v731 = vld [vmem:[%s165] sm:$0xff]
      %v732 = vld [vmem:[%s165 + $0x8] sm:$0xf]
      %s733 = scalar_lea.vmem %s1, 64
      %v734 = vld [vmem:[%s733] sm:$0xff]
      %737 = vst [vmem:[#allocation1] ss:$2 sm:$0xff] %v731
      %s738 = scalar_lea.vmem [#allocation1], 16
      %739 = vst [vmem:[%s738] ss:$2 sm:$0xff] %v732
      %v740 = vld.sshfl [vmem:[#allocation1] sm:$0xff pattern:$0x75316420]
      %v741 = vld.sshfl [vmem:[#allocation1 + $0x8] sm:$0xff pattern:$0x75316420]
      %v742 = vld.sshfl [vmem:[#allocation1 + $0x10] sm:$0xff pattern:$0x75316420]
      %743 = vrot.lane.b32.xlu0 %v740, 94
      %v744 = vpop.permute.xlu0 %743
      %745 = vrot.lane.b32.xlu0 %v741, 94
      %v746 = vpop.permute.xlu0 %745
      %747 = vrot.lane.b32.xlu0 %v742, 94
      %v748 = vpop.permute.xlu0 %747
      %vm749 = vcmask 769024
      %v750 = vsel %vm749, %v744, %v746
      %v751 = vsel %vm749, %v746, %v748
      %v753 = vsel %vm220, %v734, 0
      %v755 = vsel %vm224, %v750, 0
      %v757 = vsel %vm224, %v751, 0
      %759 = vmatpush.msra.mxu0 0.0
      %760 = vmatpush.msra.mxu0 0.0
      %761 = vmatpush.msra.mxu0 0.0
      %762 = vmatpush.msra.mxu0 0.0
      %763 = vmatpush.msra.mxu0 0.0
      %764 = vmatpush.msra.mxu0 0.0
      %765 = vmatpush.msra.mxu0 0.0
      %766 = vmatpush.msra.mxu0 0.0
      %767 = vmatpush.msra.mxu0 0.0
      %768 = vmatpush.msra.mxu0 0.0
      %769 = vmatpush.msra.mxu0 0.0
      %770 = vmatpush.msra.mxu0 0.0
      %771 = vmatpush.msra.mxu0 0.0
      %772 = vmatpush.msra.mxu0 0.0
      %773 = vmatpush.msra.mxu0 0.0
      %774 = vmatpush.msra.mxu0 %v755
      %775 = vmatmul.f32.gmra.mxu0 %v753
      %v776 = vpop.f32.mrf.mxu0
      %v777 = vadd.f32 0.0, %v776
      %778 = vdwg.mxu0
      %779 = vmatpush.msra.mxu0 0.0
      %780 = vmatpush.msra.mxu0 0.0
      %781 = vmatpush.msra.mxu0 0.0
      %782 = vmatpush.msra.mxu0 0.0
      %783 = vmatpush.msra.mxu0 0.0
      %784 = vmatpush.msra.mxu0 0.0
      %785 = vmatpush.msra.mxu0 0.0
      %786 = vmatpush.msra.mxu0 0.0
      %787 = vmatpush.msra.mxu0 0.0
      %788 = vmatpush.msra.mxu0 0.0
      %789 = vmatpush.msra.mxu0 0.0
      %790 = vmatpush.msra.mxu0 0.0
      %791 = vmatpush.msra.mxu0 0.0
      %792 = vmatpush.msra.mxu0 0.0
      %793 = vmatpush.msra.mxu0 0.0
      %794 = vmatpush.msra.mxu0 %v757
      %795 = vmatmul.f32.gmra.mxu0 %v753
      %v796 = vpop.f32.mrf.mxu0
      %v797 = vadd.f32 0.0, %v796
      %798 = vdwg.mxu0
      %v799 = vadd.f32 %v709, %v777
      %v800 = vadd.f32 %v729, %v797
      %vm801 = vcmp.lt.s32.totalorder %v196, 15
      %vm802 = vcmp.lt.s32.totalorder %v197, 15
      %v803 = vsel %vm801, %v799, 0.0
      %v804 = vsel %vm802, %v800, 0.0
      %v805 = vadd.f32 %v597, %v803
      %v806 = vadd.f32 %v598, %v804
      %v807 = vld [vmem:[%s2] sm:$0xff]
      %809 = vset.pattern.permute.xlu0 0
      %810 = vperm.xlu0 %809, %v807
      %v811 = vpop.permute.xlu0 %810
      %v813 = vadd.f32 %v805, %v811
      %v814 = vadd.f32 %v806, %v811
      %v815 = vmax.f32 %v813, 0.0
      %v816 = vmax.f32 %v814, 0.0
      %817 = vst [vmem:[%s170] sm:$0xff] %v815
      %818 = vst [vmem:[%s170 + $0x8] sm:$0xff] %v816
      %p819 = scmp.lt.s32.totalorder %s14, 1
      %s820 = scalar_select %p819, %s14, 1
      %s821 = smul.addr %s820, 2
      %s822 = smul.addr %s821, 8
      %s823 = scalar_lea.vmem %s3, %s822
      // Predicated region
      $region33: #{inconv_forward.1} parent=31 // pred_check
        %p824 = pneg %p100
      $region34: #{inconv_forward.1} parent=31 // pred_check_branch
        %826 = sbr.rel (%p824) target = $region36
      $region35: #{inconv_forward.1} parent=31 // pred_region
        _
      $region36: #{inconv_forward.1} parent=31 // pred_fallthru
        _
    $region32: #{inconv_forward.1} parent=5 // pred_fallthru
      _
    %p827 = scmp.le.s32.totalorder 2, %s9
    // Predicated region
    $region37: #{inconv_forward.1} parent=5 // pred_check
      %p828 = pneg %p827
    $region38: #{inconv_forward.1} parent=5 // pred_check_branch
      %830 = sbr.rel (%p828) target = $region40
    $region39: #{inconv_forward.1} parent=5 // pred_region
      %s831 = ssub.s32 %s9, 2
      // Predicated region
      $region41: #{inconv_forward.1} parent=39 // pred_check
        %p832 = pneg %p106
      $region42: #{inconv_forward.1} parent=39 // pred_check_branch
        %834 = sbr.rel (%p832) target = $region44
      $region43: #{inconv_forward.1} parent=39 // pred_region
        %p835 = scmp.lt.s32.totalorder %s15, 1
        %s836 = scalar_select %p835, %s15, 1
        %s837 = smul.addr %s836, 2
        %s838 = smul.addr %s837, 8
        %s839 = scalar_lea.vmem %s3, %s838
      $region44: #{inconv_forward.1} parent=39 // pred_fallthru
        _
    $region40: #{inconv_forward.1} parent=5 // pred_fallthru
      _
  $region6: #{inconv_forward.1} parent=0 // loop_footer
    %s13 = sadd.s32 1, %s9
  $region7: #{inconv_forward.1} parent=0 // loop_footer_branch
    %8 = sbr.rel target = $region3
  $region8: #{inconv_forward.1} parent=0 // loop_exit
    _

</llo_original>
